<compile_context>
chip_gen: v7x
topology: tpu7x:2x2x1
jax: 0.10.0
libtpu: 0.0.40
codegen_flags: <defaults>
</compile_context>

<pallas_src>
import math

import jax
import jax.numpy as jnp
from jax.experimental import pallas as pl
from jax.experimental.pallas import tpu as pltpu


def _affine_fwd_kernel(x_ref, scale_ref, shift_ref, y_ref):
    # x_ref:     (blk_b, blk_d)  input tile
    # scale_ref: (1, blk_d)      log-scale parameter row (f32)
    # shift_ref: (1, blk_d)      shift parameter row (f32)
    # y_ref:     (blk_b, blk_d)  output tile
    scale = scale_ref[...]                               # broadcasts over batch rows
    shift = shift_ref[...]
    y = jnp.exp(scale) * x_ref[...].astype(jnp.float32) + shift
    y_ref[...] = y.astype(y_ref.dtype)


def _choose_block(extent, target, align):
    """Pick a block size: full extent if small, else a multiple of `align`."""
    if extent <= target:
        return extent
    return max(align, (target // align) * align)


def _affine_pallas_2d(x2d, scale_row, shift_row):
    B, D = x2d.shape
    blk_b = _choose_block(B, 512, 8)      # sublane axis: multiple of 8 (or full)
    blk_d = _choose_block(D, 512, 128)    # lane axis: multiple of 128 (or full)
    grid = (pl.cdiv(B, blk_b), pl.cdiv(D, blk_d))

    itemsize = jnp.dtype(x2d.dtype).itemsize
    # x + y, double-buffered, plus the small resident param rows, plus headroom.
    vmem_bytes = 2 * 2 * blk_b * blk_d * itemsize + 2 * 2 * blk_d * 4 + (2 << 20)
    vmem_limit = int(min(max(vmem_bytes, 8 << 20), 48 << 20))  # stay under v7x's 64MiB VMEM

    return pl.pallas_call(
        _affine_fwd_kernel,
        out_shape=jax.ShapeDtypeStruct((B, D), x2d.dtype),
        grid=grid,
        in_specs=[
            pl.BlockSpec((blk_b, blk_d), lambda i, j: (i, j)),   # x tile
            pl.BlockSpec((1, blk_d), lambda i, j: (0, j)),       # scale: resident over batch axis
            pl.BlockSpec((1, blk_d), lambda i, j: (0, j)),       # shift: resident over batch axis
        ],
        out_specs=pl.BlockSpec((blk_b, blk_d), lambda i, j: (i, j)),
        compiler_params=pltpu.CompilerParams(
            dimension_semantics=("parallel", "parallel"),
            vmem_limit_bytes=vmem_limit,
        ),
    )(x2d, scale_row, shift_row)


def affine_forward(x, scale, shift):
    """Affine flow forward pass.

    Args:
      x:     (batch, dim) float32 / bfloat16
      scale: (dim,)       float32
      shift: (dim,)       float32

    Returns:
      y:       (batch, dim) same dtype as x
      log_det: (batch,)     float32
    """
    batch, dim = x.shape
    scale_f32 = scale.astype(jnp.float32)
    shift_f32 = shift.astype(jnp.float32)

    # Lane-dense repack: fold k batch rows into one lane-dense row when dim is
    # not a multiple of 128 and batch allows it (exact — params are tiled).
    k = 1
    if dim % 128 != 0:
        cand = 128 // math.gcd(dim, 128)
        if cand > 1 and batch % cand == 0:
            k = cand

    if k > 1:
        x2d = x.reshape(batch // k, k * dim)
        scale_row = jnp.tile(scale_f32, k).reshape(1, k * dim)
        shift_row = jnp.tile(shift_f32, k).reshape(1, k * dim)
        y = _affine_pallas_2d(x2d, scale_row, shift_row).reshape(batch, dim)
    else:
        y = _affine_pallas_2d(
            x, scale_f32.reshape(1, dim), shift_f32.reshape(1, dim)
        )

    # log|det J| is x-independent: sum(scale) == log(exp(sum(scale))).
    # Computed in plain JAX — no lane-width-1 output stream from the kernel.
    log_det = jnp.full((batch,), jnp.sum(scale_f32), dtype=jnp.float32)
    return y, log_det


if __name__ == "__main__":
    key = jax.random.PRNGKey(0)
    batch, dim = 64, 32

    kx, ks, kb = jax.random.split(key, 3)
    x = jax.random.normal(kx, (batch, dim), dtype=jnp.float32)
    # Module initializes nn.Parameter(torch.zeros(dim)); perturb deterministically
    # so the kernel exercises non-trivial scale/shift.
    scale = 0.1 * jax.random.normal(ks, (dim,), dtype=jnp.float32)
    shift = 0.1 * jax.random.normal(kb, (dim,), dtype=jnp.float32)

    y, log_det = jax.jit(affine_forward)(x, scale, shift)
    y = jax.block_until_ready(y)
    log_det = jax.block_until_ready(log_det)

    # Reference check in plain JAX (mirrors the PyTorch forward exactly).
    y_ref = jnp.exp(scale) * x + shift
    log_det_ref = jnp.ones((batch,), jnp.float32) * jnp.log(jnp.exp(jnp.sum(scale)))
    assert y.shape == (batch, dim) and log_det.shape == (batch,)
    assert jnp.allclose(y, y_ref, atol=1e-5, rtol=1e-5)
    assert jnp.allclose(log_det, log_det_ref, atol=1e-5, rtol=1e-5)

    print("KERNEL_OK")
</pallas_src>

<mosaic_0001>
module attributes {stable_mosaic.version = 11 : i64} {
  func.func @_affine_fwd_kernel(%arg0: i32, %arg1: i32, %arg2: memref<16x128xf32, #tpu.memory_space<vmem>>, %arg3: memref<1x128xf32, #tpu.memory_space<vmem>>, %arg4: memref<1x128xf32, #tpu.memory_space<vmem>>, %arg5: memref<16x128xf32, #tpu.memory_space<vmem>>) attributes {dimension_semantics = [#tpu.dimension_semantics<parallel>, #tpu.dimension_semantics<parallel>], iteration_bounds = array<i64: 1, 1>, scalar_prefetch = 0 : i64, scratch_operands = 0 : i64, tpu.core_type = #tpu.core_type<tc>, window_params = [{transform_indices = @transform_0, window_bounds = array<i64: 16, 128>}, {transform_indices = @transform_1, window_bounds = array<i64: 1, 128>}, {transform_indices = @transform_2, window_bounds = array<i64: 1, 128>}, {transform_indices = @transform_3, window_bounds = array<i64: 16, 128>}]} {
    %c0 = arith.constant 0 : index
    %c0_0 = arith.constant 0 : index
    %0 = vector.load %arg3[%c0, %c0_0] : memref<1x128xf32, #tpu.memory_space<vmem>>, vector<1x128xf32>
    %c0_1 = arith.constant 0 : index
    %c0_2 = arith.constant 0 : index
    %1 = vector.load %arg4[%c0_1, %c0_2] : memref<1x128xf32, #tpu.memory_space<vmem>>, vector<1x128xf32>
    %2 = math.exp %0 : vector<1x128xf32>
    %c0_3 = arith.constant 0 : index
    %c0_4 = arith.constant 0 : index
    %3 = vector.load %arg2[%c0_3, %c0_4] : memref<16x128xf32, #tpu.memory_space<vmem>>, vector<16x128xf32>
    %4 = vector.broadcast %2 : vector<1x128xf32> to vector<16x128xf32>
    %5 = arith.mulf %4, %3 : vector<16x128xf32>
    %6 = vector.broadcast %1 : vector<1x128xf32> to vector<16x128xf32>
    %7 = arith.addf %5, %6 : vector<16x128xf32>
    %c0_5 = arith.constant 0 : index
    %c0_6 = arith.constant 0 : index
    %8 = vector.load %arg5[%c0_5, %c0_6] : memref<16x128xf32, #tpu.memory_space<vmem>>, vector<16x128xf32>
    tpu.vector_store %arg5[%c0_5, %c0_6], %7 {strides = array<i32>} : memref<16x128xf32, #tpu.memory_space<vmem>>, vector<16x128xf32>,
    return
  }
  func.func @transform_0(%arg0: i32, %arg1: i32) -> (i32, i32) {
    %c0_i32 = arith.constant 0 : i32
    return %arg0, %arg1 : i32, i32
  }
  func.func @transform_1(%arg0: i32, %arg1: i32) -> (i32, i32) {
    %c0_i32 = arith.constant 0 : i32
    %c0_i32_0 = arith.constant 0 : i32
    return %c0_i32, %arg1 : i32, i32
  }
  func.func @transform_2(%arg0: i32, %arg1: i32) -> (i32, i32) {
    %c0_i32 = arith.constant 0 : i32
    %c0_i32_0 = arith.constant 0 : i32
    return %c0_i32, %arg1 : i32, i32
  }
  func.func @transform_3(%arg0: i32, %arg1: i32) -> (i32, i32) {
    %c0_i32 = arith.constant 0 : i32
    return %arg0, %arg1 : i32, i32
  }
}

</mosaic_0001>

<llo_original>
// kernel: tile.14
$region0: #{tile.14}
  %s0 = inlined_call_operand.vmem [shape: f32[4,32], index: 0, kind: input, shape index: {}]
  %s1 = inlined_call_operand.vmem [shape: f32[1,128], index: 1, kind: output, shape index: {}]
  $region1: #{tile.14} parent=0
    #allocation0 [shape = 'u8[4096]{0}', space=vmem, size = 0x1000, scoped, tag = 'scoped mem for output reshape']
    #allocation1 [shape = 'u8[4096]{0}', space=vmem, size = 0x1000, scoped, tag = 'scoped mem for input reshape']
    %s3 = sshllo.u32 0, 4
    %v4 = vld [vmem:[%s0] sm:%s3]
    %5 = vst [vmem:[#allocation1] sm:%s3] %v4
    %v6 = vld [vmem:[#allocation1] sm:$0x1]
    %vm7 = vcmask 261120
    %8 = vst.msk [vmem:[#allocation0] sm:$0x1] %vm7, %v6
    %s9 = scalar_lea.vmem [#allocation1], 3
    %v10 = vld [vmem:[%s9] sm:$0x1]
    %11 = vrot.lane.b32.xlu0 %v10, 96
    %v12 = vpop.permute.xlu0 %11
    %vm13 = vcmask 1048320
    %14 = vst.msk [vmem:[#allocation0] sm:$0x1] %vm13, %v12
    %s15 = scalar_lea.vmem [#allocation1], 2
    %v16 = vld [vmem:[%s15] sm:$0x1]
    %17 = vrot.lane.b32.xlu0 %v16, 64
    %v18 = vpop.permute.xlu0 %17
    %vm19 = vcmask 785920
    %20 = vst.msk [vmem:[#allocation0] sm:$0x1] %vm19, %v18
    %s21 = scalar_lea.vmem [#allocation1], 1
    %v22 = vld [vmem:[%s21] sm:$0x1]
    %23 = vrot.lane.b32.xlu0 %v22, 32
    %v24 = vpop.permute.xlu0 %23
    %vm25 = vcmask 523520
    %26 = vst.msk [vmem:[#allocation0] sm:$0x1] %vm25, %v24
    %s28 = sshllo.u32 0, 1
    %v30 = vld [vmem:[#allocation0] sm:%s28]
    %s31 = sshllo.u32 0, 1
    %32 = vst [vmem:[%s1] sm:%s31] %v30

// kernel: tile.13
$region0: #{tile.13}
  #allocation0 [shape = 's32[1]{0}', space=sflag, size = 0x4, scoped, tag = 'scoped memory for tile.13']
  %s0 = inlined_call_operand.vmem [shape: f32[32], index: 0, kind: input, shape index: {}]
  %s1 = inlined_call_operand.vmem [shape: f32[4,32], index: 1, kind: output, shape index: {}]
  // Predicated region
  $region2: #{tile.13} parent=0 // pred_check
    _
  $region3: #{tile.13} parent=0 // pred_check_branch
    %3 = sbr.rel (0) target = $region5
  $region4: #{tile.13} parent=0 // pred_region
    _
  $region5: #{tile.13} parent=0 // pred_fallthru
    _
  %v4 = vld [vmem:[%s0] ss:$0 sm:$0xff]
  %5 = vst [vmem:[%s1] sm:$0xf] %v4

// kernel: affine_forward.1
$region0: #{affine_forward.1}
  #allocation0 [shape = 'u32[]', space=smem, size = 0x4, offset = 0x4, fixed_abs, tag = 'smem constant byte address 0x4 - core index']
  #allocation1 [shape = 'u32[144,128]{1,0:T(1,128)}', space=vmem, size = 0x12000, scoped, tag = 'internal scratch']
  %s0 = inlined_call_operand.vmem [shape: f32[16,128], index: 0, kind: input, shape index: {}]
  %s1 = inlined_call_operand.vmem [shape: f32[1,128], index: 1, kind: input, shape index: {}]
  %s2 = inlined_call_operand.vmem [shape: f32[1,128], index: 2, kind: input, shape index: {}]
  %s3 = inlined_call_operand.vmem [shape: f32[16,128], index: 3, kind: output, shape index: {}]
  %s4 = sld [smem:[#allocation0]]
  $region22: #{affine_forward.1} parent=0
    _
  %s6 = ssub.s32 1, %s4
  %s7 = scalar_select 0, %s6, %s4
  // Predicated region
  $region2: #{affine_forward.1} parent=0 // pred_check
    _
  $region3: #{affine_forward.1} parent=0 // pred_check_branch
    %9 = sbr.rel (0) target = $region5
  $region4: #{affine_forward.1} parent=0 // pred_region
    _
  $region5: #{affine_forward.1} parent=0 // pred_fallthru
    _
  // Predicated region
  $region6: #{affine_forward.1} parent=0 // pred_check
    _
  $region7: #{affine_forward.1} parent=0 // pred_check_branch
    %11 = sbr.rel (0) target = $region9
  $region8: #{affine_forward.1} parent=0 // pred_region
    _
  $region9: #{affine_forward.1} parent=0 // pred_fallthru
    _
  // Predicated region
  $region10: #{affine_forward.1} parent=0 // pred_check
    _
  $region11: #{affine_forward.1} parent=0 // pred_check_branch
    %13 = sbr.rel (0) target = $region13
  $region12: #{affine_forward.1} parent=0 // pred_region
    _
  $region13: #{affine_forward.1} parent=0 // pred_fallthru
    _
  %v14 = vld [vmem:[%s1] sm:$0x1]
  %v15 = vld [vmem:[%s2] sm:$0x1]
  %v16 = vmul.f32 %v14, 1.442695
  %v17 = vpow.pop %v16
  %v18 = vld [vmem:[%s0] sm:$0xff]
  %v19 = vld [vmem:[%s0 + $0x8] sm:$0xff]
  %v21 = vlaneseq
  %v22 = vshrl.u32 %v21, 7
  %v23 = vsub.s32 0, %v22
  %v24 = vrot.slane %v17, %v23
  %v26 = vmul.f32 %v24, %v18
  %v27 = vmul.f32 %v24, %v19
  %v29 = vlaneseq
  %v30 = vshrl.u32 %v29, 7
  %v31 = vsub.s32 0, %v30
  %v32 = vrot.slane %v15, %v31
  %v34 = vadd.f32 %v26, %v32
  %v35 = vadd.f32 %v27, %v32
  %36 = vst [vmem:[%s3] sm:$0xff] %v34
  %37 = vst [vmem:[%s3 + $0x8] sm:$0xff] %v35
  // Predicated region
  $region14: #{affine_forward.1} parent=0 // pred_check
    _
  $region15: #{affine_forward.1} parent=0 // pred_check_branch
    %39 = sbr.rel (0) target = $region17
  $region16: #{affine_forward.1} parent=0 // pred_region
    _
  $region17: #{affine_forward.1} parent=0 // pred_fallthru
    _
  // Predicated region
  $region18: #{affine_forward.1} parent=0 // pred_check
    _
  $region19: #{affine_forward.1} parent=0 // pred_check_branch
    %41 = sbr.rel (0) target = $region21
  $region20: #{affine_forward.1} parent=0 // pred_region
    _
  $region21: #{affine_forward.1} parent=0 // pred_fallthru
    _

</llo_original>
